<compile_context>
chip_gen: v7x
topology: tpu7x:2x2x1
jax: 0.10.0
libtpu: 0.0.40
codegen_flags: <defaults>
</compile_context>

<pallas_src>
import jax
import jax.numpy as jnp
import numpy as np
from jax.experimental import pallas as pl
from jax.experimental.pallas import tpu as pltpu


def negpos_kernel(x_ref, mn_ref, md_ref, mx_ref, ineg_ref, ipos_ref, o_ref):
    x = x_ref[...].astype(jnp.float32)        # (TB, F) tile
    mn = mn_ref[...]                          # (1, F) -> broadcast over rows
    md = md_ref[...]
    mx = mx_ref[...]

    # clamp(val, min, max)
    x = jnp.minimum(jnp.maximum(x, mn), mx)

    # Single select instead of two masked branches. The hoisted reciprocals
    # are 0 for degenerate ranges; the clamp guarantees the degenerate branch
    # is either never selected (min==mid) or has a zero numerator (mid==max),
    # reproducing torch.nan_to_num(_, 0, 0, 0) without isfinite passes.
    neg = (x - mn) * ineg_ref[...] - 1.0
    pos = (x - md) * ipos_ref[...]
    o_ref[...] = jnp.where(x < md, neg, pos).astype(o_ref.dtype)


def negpos_forward(val, p_min, p_mid, p_max, *, target_rows=1024):
    """val: (B, F) float; p_min/p_mid/p_max: (F,) float. Returns (B, F) f32."""
    val = jnp.asarray(val)
    B, F = val.shape

    p_min = jnp.asarray(p_min, jnp.float32)
    p_mid = jnp.asarray(p_mid, jnp.float32)
    p_max = jnp.asarray(p_max, jnp.float32)

    # Lane-dense folding: pack several rows into the 128-lane axis when F < 128.
    fold = 1
    if F < 128 and 128 % F == 0:
        cand = 128 // F
        if B % cand == 0:
            fold = cand
    B2, F2 = B // fold, F * fold

    x = val.astype(jnp.float32).reshape(B2, F2)          # contiguous reshape
    mn = jnp.tile(p_min, fold).reshape(1, F2)
    md = jnp.tile(p_mid, fold).reshape(1, F2)
    mx = jnp.tile(p_max, fold).reshape(1, F2)

    # Hoisted, degeneracy-safe reciprocals (computed once on (1, F2)).
    inv_neg = jnp.where(md > mn, 1.0 / jnp.where(md > mn, md - mn, 1.0), 0.0)
    inv_pos = jnp.where(mx > md, 1.0 / jnp.where(mx > md, mx - md, 1.0), 0.0)

    # Row-tile size: multiple of 8, capped at ~4 MiB per f32 tile so the
    # double-buffered in+out tiles fit comfortably on every generation
    # (including v7x's 64 MiB physical / 32 MiB scoped VMEM).
    if B2 <= 8:
        tb = B2                                  # full dim satisfies tiling rule
    else:
        max_rows = max(8, (4 * 1024 * 1024) // (F2 * 4))
        tb = min(B2, target_rows, max_rows)
        tb = max(8, (tb // 8) * 8)

    grid = (pl.cdiv(B2, tb),)

    out = pl.pallas_call(
        negpos_kernel,
        out_shape=jax.ShapeDtypeStruct((B2, F2), jnp.float32),
        grid=grid,
        in_specs=[
            pl.BlockSpec((tb, F2), lambda i: (i, 0)),
            pl.BlockSpec((1, F2), lambda i: (0, 0)),
            pl.BlockSpec((1, F2), lambda i: (0, 0)),
            pl.BlockSpec((1, F2), lambda i: (0, 0)),
            pl.BlockSpec((1, F2), lambda i: (0, 0)),
            pl.BlockSpec((1, F2), lambda i: (0, 0)),
        ],
        out_specs=pl.BlockSpec((tb, F2), lambda i: (i, 0)),
        compiler_params=pltpu.CompilerParams(
            dimension_semantics=("parallel",)),
    )(x, mn, md, mx, inv_neg, inv_pos)

    return out.reshape(B, F)


def negpos_ref(val, p_min, p_mid, p_max):
    """Pure-numpy reference mirroring the torch forward."""
    v = np.clip(np.asarray(val, dtype=np.float32), p_min, p_max)
    with np.errstate(divide="ignore", invalid="ignore"):
        neg = (v < p_mid).astype(np.float32) * ((v - p_min) / (p_mid - p_min) - 1.0)
        pos = (v >= p_mid).astype(np.float32) * (v - p_mid) / (p_max - p_mid)
    neg = np.nan_to_num(neg, nan=0.0, posinf=0.0, neginf=0.0)
    pos = np.nan_to_num(pos, nan=0.0, posinf=0.0, neginf=0.0)
    return neg + pos


def _make_params(F):
    # Deterministic params mirroring NegPos.initialize: broadcast, then enforce
    # min <= mid <= max. Include a degenerate feature (min==mid==max) and a
    # half-degenerate one (mid==max) to exercise the nan_to_num paths.
    base_min = np.full((F,), -1.0) - 0.1 * np.arange(F)
    base_mid = np.zeros((F,))
    base_max = np.full((F,), 2.0) + 0.05 * np.arange(F)
    base_min[3] = base_mid[3] = base_max[3] = 0.0   # min == mid == max
    base_max[5] = base_mid[5]                       # mid == max, min < mid
    p_min = np.minimum(base_min, base_mid).astype(np.float32)
    p_mid = base_mid.astype(np.float32)
    p_max = np.maximum(base_max, base_mid).astype(np.float32)
    return p_min, p_mid, p_max


if __name__ == "__main__":
    key = jax.random.PRNGKey(0)

    # Case 1: small demo shape (batch=8, features=32) -> lane-folded to (2, 128).
    B, F = 8, 32
    p_min, p_mid, p_max = _make_params(F)
    x = jax.random.normal(key, (B, F), dtype=jnp.float32) * 3.0
    out = jax.block_until_ready(negpos_forward(x, p_min, p_mid, p_max))
    np.testing.assert_allclose(
        np.asarray(out), negpos_ref(np.asarray(x), p_min, p_mid, p_max),
        rtol=1e-5, atol=1e-5)

    # Case 2: exercise a multi-step grid (batch=64 folds to 16 rows, tile=8 -> 2 steps).
    B2 = 64
    x2 = jax.random.normal(jax.random.PRNGKey(1), (B2, F), dtype=jnp.float32) * 3.0
    out2 = jax.block_until_ready(
        negpos_forward(x2, p_min, p_mid, p_max, target_rows=8))
    np.testing.assert_allclose(
        np.asarray(out2), negpos_ref(np.asarray(x2), p_min, p_mid, p_max),
        rtol=1e-5, atol=1e-5)

    print("KERNEL_OK")
</pallas_src>

<mosaic_0001>
module attributes {stable_mosaic.version = 11 : i64} {
  func.func @negpos_kernel(%arg0: i32, %arg1: memref<2x128xf32, #tpu.memory_space<vmem>>, %arg2: memref<1x128xf32, #tpu.memory_space<vmem>>, %arg3: memref<1x128xf32, #tpu.memory_space<vmem>>, %arg4: memref<1x128xf32, #tpu.memory_space<vmem>>, %arg5: memref<1x128xf32, #tpu.memory_space<vmem>>, %arg6: memref<1x128xf32, #tpu.memory_space<vmem>>, %arg7: memref<2x128xf32, #tpu.memory_space<vmem>>) attributes {dimension_semantics = [#tpu.dimension_semantics<parallel>], iteration_bounds = array<i64: 1>, scalar_prefetch = 0 : i64, scratch_operands = 0 : i64, tpu.core_type = #tpu.core_type<tc>, window_params = [{transform_indices = @transform_0, window_bounds = array<i64: 2, 128>}, {pipeline_mode = #tpu.pipeline_mode<synchronous>, transform_indices = @transform_1, window_bounds = array<i64: 1, 128>}, {pipeline_mode = #tpu.pipeline_mode<synchronous>, transform_indices = @transform_2, window_bounds = array<i64: 1, 128>}, {pipeline_mode = #tpu.pipeline_mode<synchronous>, transform_indices = @transform_3, window_bounds = array<i64: 1, 128>}, {pipeline_mode = #tpu.pipeline_mode<synchronous>, transform_indices = @transform_4, window_bounds = array<i64: 1, 128>}, {pipeline_mode = #tpu.pipeline_mode<synchronous>, transform_indices = @transform_5, window_bounds = array<i64: 1, 128>}, {transform_indices = @transform_6, window_bounds = array<i64: 2, 128>}]} {
    %c0 = arith.constant 0 : index
    %c0_0 = arith.constant 0 : index
    %0 = vector.load %arg1[%c0, %c0_0] : memref<2x128xf32, #tpu.memory_space<vmem>>, vector<2x128xf32>
    %c0_1 = arith.constant 0 : index
    %c0_2 = arith.constant 0 : index
    %1 = vector.load %arg2[%c0_1, %c0_2] : memref<1x128xf32, #tpu.memory_space<vmem>>, vector<1x128xf32>
    %c0_3 = arith.constant 0 : index
    %c0_4 = arith.constant 0 : index
    %2 = vector.load %arg3[%c0_3, %c0_4] : memref<1x128xf32, #tpu.memory_space<vmem>>, vector<1x128xf32>
    %c0_5 = arith.constant 0 : index
    %c0_6 = arith.constant 0 : index
    %3 = vector.load %arg4[%c0_5, %c0_6] : memref<1x128xf32, #tpu.memory_space<vmem>>, vector<1x128xf32>
    %4 = vector.broadcast %1 : vector<1x128xf32> to vector<2x128xf32>
    %5 = arith.maximumf %0, %4 : vector<2x128xf32>
    %6 = vector.broadcast %3 : vector<1x128xf32> to vector<2x128xf32>
    %7 = arith.minimumf %5, %6 : vector<2x128xf32>
    %8 = vector.broadcast %1 : vector<1x128xf32> to vector<2x128xf32>
    %9 = arith.subf %7, %8 : vector<2x128xf32>
    %c0_7 = arith.constant 0 : index
    %c0_8 = arith.constant 0 : index
    %10 = vector.load %arg5[%c0_7, %c0_8] : memref<1x128xf32, #tpu.memory_space<vmem>>, vector<1x128xf32>
    %11 = vector.broadcast %10 : vector<1x128xf32> to vector<2x128xf32>
    %12 = arith.mulf %9, %11 : vector<2x128xf32>
    %cst = arith.constant 1.000000e+00 : f32
    %13 = vector.broadcast %cst : f32 to vector<2x128xf32>
    %14 = arith.subf %12, %13 : vector<2x128xf32>
    %15 = vector.broadcast %2 : vector<1x128xf32> to vector<2x128xf32>
    %16 = arith.subf %7, %15 : vector<2x128xf32>
    %c0_9 = arith.constant 0 : index
    %c0_10 = arith.constant 0 : index
    %17 = vector.load %arg6[%c0_9, %c0_10] : memref<1x128xf32, #tpu.memory_space<vmem>>, vector<1x128xf32>
    %18 = vector.broadcast %17 : vector<1x128xf32> to vector<2x128xf32>
    %19 = arith.mulf %16, %18 : vector<2x128xf32>
    %20 = vector.broadcast %2 : vector<1x128xf32> to vector<2x128xf32>
    %21 = arith.cmpf olt, %7, %20 : vector<2x128xf32>
    %22 = arith.select %21, %14, %19 : vector<2x128xi1>, vector<2x128xf32>
    %c0_11 = arith.constant 0 : index
    %c0_12 = arith.constant 0 : index
    %23 = vector.load %arg7[%c0_11, %c0_12] : memref<2x128xf32, #tpu.memory_space<vmem>>, vector<2x128xf32>
    tpu.vector_store %arg7[%c0_11, %c0_12], %22 {strides = array<i32>} : memref<2x128xf32, #tpu.memory_space<vmem>>, vector<2x128xf32>,
    return
  }
  func.func @transform_0(%arg0: i32) -> (i32, i32) {
    %c0_i32 = arith.constant 0 : i32
    %c0_i32_0 = arith.constant 0 : i32
    return %arg0, %c0_i32 : i32, i32
  }
  func.func @transform_1(%arg0: i32) -> (i32, i32) {
    %c0_i32 = arith.constant 0 : i32
    %c0_i32_0 = arith.constant 0 : i32
    %c0_i32_1 = arith.constant 0 : i32
    return %c0_i32, %c0_i32_0 : i32, i32
  }
  func.func @transform_2(%arg0: i32) -> (i32, i32) {
    %c0_i32 = arith.constant 0 : i32
    %c0_i32_0 = arith.constant 0 : i32
    %c0_i32_1 = arith.constant 0 : i32
    return %c0_i32, %c0_i32_0 : i32, i32
  }
  func.func @transform_3(%arg0: i32) -> (i32, i32) {
    %c0_i32 = arith.constant 0 : i32
    %c0_i32_0 = arith.constant 0 : i32
    %c0_i32_1 = arith.constant 0 : i32
    return %c0_i32, %c0_i32_0 : i32, i32
  }
  func.func @transform_4(%arg0: i32) -> (i32, i32) {
    %c0_i32 = arith.constant 0 : i32
    %c0_i32_0 = arith.constant 0 : i32
    %c0_i32_1 = arith.constant 0 : i32
    return %c0_i32, %c0_i32_0 : i32, i32
  }
  func.func @transform_5(%arg0: i32) -> (i32, i32) {
    %c0_i32 = arith.constant 0 : i32
    %c0_i32_0 = arith.constant 0 : i32
    %c0_i32_1 = arith.constant 0 : i32
    return %c0_i32, %c0_i32_0 : i32, i32
  }
  func.func @transform_6(%arg0: i32) -> (i32, i32) {
    %c0_i32 = arith.constant 0 : i32
    %c0_i32_0 = arith.constant 0 : i32
    return %arg0, %c0_i32 : i32, i32
  }
}

</mosaic_0001>

<llo_original>
// kernel: tpu_custom_call.1
$region0: #{tpu_custom_call.1}
  #allocation0 [shape = 'u32[]', space=smem, size = 0x4, offset = 0x4, fixed_abs, tag = 'smem constant byte address 0x4 - core index']
  #allocation1 [shape = 'u32[144,128]{1,0:T(1,128)}', space=vmem, size = 0x12000, scoped, tag = 'internal scratch']
  %s0 = inlined_call_operand.hbm [shape: f32[2,128], index: 0, kind: input, shape index: {}]
  %s1 = inlined_call_operand.vmem [shape: f32[1,128], index: 1, kind: input, shape index: {}]
  %s2 = inlined_call_operand.vmem [shape: f32[1,128], index: 2, kind: input, shape index: {}]
  %s3 = inlined_call_operand.vmem [shape: f32[1,128], index: 3, kind: input, shape index: {}]
  %s4 = inlined_call_operand.vmem [shape: f32[1,128], index: 4, kind: input, shape index: {}]
  %s5 = inlined_call_operand.vmem [shape: f32[1,128], index: 5, kind: input, shape index: {}]
  %s6 = inlined_call_operand.hbm [shape: f32[2,128], index: 6, kind: output, shape index: {}]
  %s7 = sld [smem:[#allocation0]]
  $region38: #{tpu_custom_call.1} parent=0
    _
  %s9 = ssub.s32 1, %s7
  %s10 = scalar_select 0, %s9, %s7
  $region1: #{tpu_custom_call.1} parent=0
    #allocation2 [shape = 'u8[1024]{0}', space=vmem, size = 0x400, scoped, tag = 'input window, operand 0, single buffered']
    #allocation3 [shape = 's32[1]{0}', space=sflag, size = 0x4, scoped, tag = 'scoped memory for tpu_custom_call.1']
    #allocation4 [shape = 's32[1]{0}', space=sflag, size = 0x4, scoped, tag = 'scoped memory for tpu_custom_call.1']
    #allocation5 [shape = 'u8[1024]{0}', space=vmem, size = 0x400, scoped, tag = 'output window, operand 0, single buffered']
    %11 = vsyncpa [#allocation3], 0
    %12 = vsyncpa [#allocation4], 0
    // Predicated region
    $region2: #{tpu_custom_call.1} parent=1 // pred_check
      _
    $region3: #{tpu_custom_call.1} parent=1 // pred_check_branch
      %14 = sbr.rel (0) target = $region5
    $region4: #{tpu_custom_call.1} parent=1 // pred_region
      %s16 = ssub.s32 32, 32
      %17 = vsyncadd [#allocation3], %s16
      %s19 = sshll.u32 [#allocation2], 4
      %s20 = int_to_ptr.vmem [resolvable:$true] %s19
      %22 = dma.hbm_to_vmem [thread:$0]  %s0, 32, %s20, [#allocation3]
    $region5: #{tpu_custom_call.1} parent=1 // pred_fallthru
      _
    // Predicated region
    $region6: #{tpu_custom_call.1} parent=1 // pred_check
      _
    $region7: #{tpu_custom_call.1} parent=1 // pred_check_branch
      %24 = sbr.rel (0) target = $region9
    $region8: #{tpu_custom_call.1} parent=1 // pred_region
      _
    $region9: #{tpu_custom_call.1} parent=1 // pred_fallthru
      _
    // Predicated region
    $region10: #{tpu_custom_call.1} parent=1 // pred_check
      _
    $region11: #{tpu_custom_call.1} parent=1 // pred_check_branch
      %26 = sbr.rel (0) target = $region13
    $region12: #{tpu_custom_call.1} parent=1 // pred_region
      _
    $region13: #{tpu_custom_call.1} parent=1 // pred_fallthru
      _
    // Predicated region
    $region14: #{tpu_custom_call.1} parent=1 // pred_check
      _
    $region15: #{tpu_custom_call.1} parent=1 // pred_check_branch
      %28 = sbr.rel (0) target = $region17
    $region16: #{tpu_custom_call.1} parent=1 // pred_region
      _
    $region17: #{tpu_custom_call.1} parent=1 // pred_fallthru
      _
    // Predicated region
    $region18: #{tpu_custom_call.1} parent=1 // pred_check
      _
    $region19: #{tpu_custom_call.1} parent=1 // pred_check_branch
      %30 = sbr.rel (0) target = $region21
    $region20: #{tpu_custom_call.1} parent=1 // pred_region
      _
    $region21: #{tpu_custom_call.1} parent=1 // pred_fallthru
      _
    // Predicated region
    $region22: #{tpu_custom_call.1} parent=1 // pred_check
      _
    $region23: #{tpu_custom_call.1} parent=1 // pred_check_branch
      %32 = sbr.rel (0) target = $region25
    $region24: #{tpu_custom_call.1} parent=1 // pred_region
      _
    $region25: #{tpu_custom_call.1} parent=1 // pred_fallthru
      _
    // Predicated region
    $region26: #{tpu_custom_call.1} parent=1 // pred_check
      _
    $region27: #{tpu_custom_call.1} parent=1 // pred_check_branch
      %34 = sbr.rel (0) target = $region29
    $region28: #{tpu_custom_call.1} parent=1 // pred_region
      %35 = dma.done [#allocation3], 32
    $region29: #{tpu_custom_call.1} parent=1 // pred_fallthru
      _
    %v36 = vld [vmem:[#allocation2] sm:$0x3]
    %v37 = vld [vmem:[%s1] sm:$0x1]
    %v38 = vld [vmem:[%s2] sm:$0x1]
    %v39 = vld [vmem:[%s3] sm:$0x1]
    %v41 = vlaneseq
    %v42 = vshrl.u32 %v41, 7
    %v43 = vsub.s32 0, %v42
    %v44 = vrot.slane %v37, %v43
    %v46 = vmax.f32 %v36, %v44
    %v48 = vlaneseq
    %v49 = vshrl.u32 %v48, 7
    %v50 = vsub.s32 0, %v49
    %v51 = vrot.slane %v39, %v50
    %v53 = vmin.f32 %v46, %v51
    %v54 = vsub.f32 %v53, %v44
    %v55 = vld [vmem:[%s4] sm:$0x1]
    %v57 = vlaneseq
    %v58 = vshrl.u32 %v57, 7
    %v59 = vsub.s32 0, %v58
    %v60 = vrot.slane %v55, %v59
    %v62 = vmul.f32 %v54, %v60
    %v63 = vsub.f32 %v62, 1.0
    %v65 = vlaneseq
    %v66 = vshrl.u32 %v65, 7
    %v67 = vsub.s32 0, %v66
    %v68 = vrot.slane %v38, %v67
    %v70 = vsub.f32 %v53, %v68
    %v71 = vld [vmem:[%s5] sm:$0x1]
    %v73 = vlaneseq
    %v74 = vshrl.u32 %v73, 7
    %v75 = vsub.s32 0, %v74
    %v76 = vrot.slane %v71, %v75
    %v78 = vmul.f32 %v70, %v76
    %vm79 = vcmp.lt.f32.partialorder %v53, %v68
    %v80 = vsel %vm79, %v63, %v78
    %81 = vst [vmem:[#allocation5] sm:$0x3] %v80
    // Predicated region
    $region30: #{tpu_custom_call.1} parent=1 // pred_check
      _
    $region31: #{tpu_custom_call.1} parent=1 // pred_check_branch
      %83 = sbr.rel (0) target = $region33
    $region32: #{tpu_custom_call.1} parent=1 // pred_region
      %s85 = ssub.s32 32, 32
      %86 = vsyncadd [#allocation4], %s85
      %s88 = sshll.u32 [#allocation5], 4
      %s89 = int_to_ptr.vmem [resolvable:$true] %s88
      %91 = dma.vmem_to_hbm [thread:$0]  %s89, 32, %s6, [#allocation4]
    $region33: #{tpu_custom_call.1} parent=1 // pred_fallthru
      _
    // Predicated region
    $region34: #{tpu_custom_call.1} parent=1 // pred_check
      _
    $region35: #{tpu_custom_call.1} parent=1 // pred_check_branch
      %93 = sbr.rel (0) target = $region37
    $region36: #{tpu_custom_call.1} parent=1 // pred_region
      %94 = dma.done [#allocation4], 32
    $region37: #{tpu_custom_call.1} parent=1 // pred_fallthru
      _
    %95 = vsyncpa [#allocation3], 1
    %96 = vsyncpa [#allocation4], 1

</llo_original>
